<compile_context>
chip_gen: v7x
topology: tpu7x:2x2x1
jax: 0.10.0
libtpu: 0.0.40
codegen_flags: <defaults>
</compile_context>

<pallas_src>
import functools

import jax
import jax.numpy as jnp
from jax.experimental import pallas as pl
from jax.experimental.pallas import tpu as pltpu

_CLAMP_MIN = -1e9
_NUM_CORES = 2                       # megacore split (v7x has 2 TCs; harmless on 1-TC chips)
_MAX_ROW_TILE = 1024
_BLOCK_BYTE_BUDGET = 4 * 1024 * 1024  # per input block → ~8 MiB double-buffered


def _round_up(x, m):
    return ((x + m - 1) // m) * m


def _pick_row_tile(rows, V, itemsize):
    """Largest sublane-aligned row tile that keeps one block within the VMEM budget."""
    packing = max(8, 32 // max(itemsize, 1))          # f32:8, bf16:16, int8:32
    t = _BLOCK_BYTE_BUDGET // max(V * itemsize, 1)
    t = max(packing, min(_MAX_ROW_TILE, (t // packing) * packing))
    t = min(t, _round_up(max(rows, 1), packing))      # don't exceed the row count
    return t


def _uniform_extension_entropy(mode, V):
    """Per-row entropy of the uniform (1/V) time-extension rows, per mode."""
    if mode in ("logits", "probs"):
        return jnp.log(jnp.float32(V))
    if mode == "logprobs":
        return -jnp.exp(jnp.float32(1.0 / V))
    raise ValueError(f"mode '{mode}' unknown.")


def _entropy_kernel(mode, rows, row_tile, blocks_per_core,
                    x_ref, m_ref, esum_ref):
    core = pl.program_id(0)
    step = pl.program_id(1)

    @pl.when(step == 0)
    def _():
        esum_ref[...] = jnp.zeros_like(esum_ref)

    # Rows of the flattened (rows, V) problem covered by this block. Out-of-range
    # rows (ragged last block / duplicated clamped block on the idle core) are
    # masked so they contribute exactly 0 and stay finite.
    blk = core * blocks_per_core + step
    row0 = blk * row_tile
    row_ids = row0 + jax.lax.broadcasted_iota(jnp.int32, (row_tile, 1), 0)
    valid = row_ids < rows                                     # (row_tile, 1)

    m = jnp.where(valid, m_ref[...].astype(jnp.float32), 0.0)  # (row_tile, 1)
    x = jnp.where(valid, x_ref[...].astype(jnp.float32), 0.0)  # (row_tile, V)

    if mode == "logits":
        # p = softmax(x); EUP reciprocal + multiply instead of broadcast divide.
        xmax = jnp.max(x, axis=-1, keepdims=True)
        ex = jnp.exp(x - xmax)
        p = ex * pl.reciprocal(jnp.sum(ex, axis=-1, keepdims=True), approx=False)
        # logprobs = log_softmax(p): p ∈ [0,1] → no max-stabilization or clamp needed.
        logp = p - jnp.log(jnp.sum(jnp.exp(p), axis=-1, keepdims=True))
    elif mode == "probs":
        p = x
        logp = jnp.maximum(jnp.log(x), _CLAMP_MIN)
    elif mode == "logprobs":
        logp = jnp.maximum(x, _CLAMP_MIN)
        p = jnp.exp(x)
    else:
        raise ValueError(f"mode '{mode}' unknown.")

    ent = -jnp.sum(p * logp, axis=-1, keepdims=True)           # (row_tile, 1)
    esum_ref[...] += jnp.sum(ent * m).reshape(1, 1, 1)


def entropy_loss(probs, golds, mask=None, *, mode="logits", reduction="mean",
                 ignore_index=-100, contrib=1.0, maximize=True, row_tile=None):
    """JAX/Pallas equivalent of EntropyLoss.forward (2-D gold-mask path)."""
    B, Tp, V = probs.shape
    Tg = golds.shape[1]

    # --- gold mask (glue) ---
    if mask is not None and mask.ndim == 3:
        # TODO(synk): 3-D element-wise entropy-mask path not implemented here.
        raise NotImplementedError("only the 2-D gold-mask path is implemented")
    if mask is not None:
        gold_mask = mask.astype(bool)
        if ignore_index >= 0:           # same guard as the PyTorch module
            gold_mask = gold_mask & (golds != ignore_index)
    elif ignore_index >= 0:
        gold_mask = golds != ignore_index
    else:
        raise NotImplementedError("need a 2-D mask or ignore_index >= 0")
    gm = gold_mask.astype(jnp.float32)                          # (B, Tg)

    # --- time alignment without concatenates ---
    # Kernel covers the first Tk = min(Tp, Tg) steps; the Tp < Tg uniform
    # extension rows have a closed-form entropy and are added analytically.
    Tk = min(Tp, Tg)
    x_k = probs[:, :Tk] if Tp > Tg else probs
    gm_k = gm[:, :Tk] if Tg > Tk else gm

    rows = B * Tk
    x2 = x_k.reshape(rows, V)             # keep model dtype (bf16 stays bf16 in HBM)
    m2 = gm_k.reshape(rows, 1)

    itemsize = jnp.dtype(x2.dtype).itemsize
    if row_tile is None:
        row_tile = _pick_row_tile(rows, V, itemsize)

    total_blocks = -(-rows // row_tile)
    blocks_per_core = -(-total_blocks // _NUM_CORES)
    grid = (_NUM_CORES, blocks_per_core)
    max_blk = total_blocks - 1

    def row_block_map(c, i):
        # Clamp so the DMA never reads a fully out-of-bounds block; duplicated
        # blocks contribute nothing (row-validity mask in the kernel).
        return (jnp.minimum(c * blocks_per_core + i, max_blk), 0)

    block_bytes = row_tile * (V * itemsize + 4)
    vmem_bytes = int(min(max(4 * block_bytes + (2 << 20), 16 << 20), 32 << 20))

    kernel = functools.partial(_entropy_kernel, mode, rows, row_tile,
                               blocks_per_core)
    partial_sums = pl.pallas_call(
        kernel,
        out_shape=jax.ShapeDtypeStruct((_NUM_CORES, 1, 1), jnp.float32),
        grid_spec=pltpu.PrefetchScalarGridSpec(
            num_scalar_prefetch=0,
            grid=grid,
            in_specs=[pl.BlockSpec((row_tile, V), row_block_map),
                      pl.BlockSpec((row_tile, 1), row_block_map)],
            out_specs=pl.BlockSpec((1, 1, 1), lambda c, i: (c, 0, 0))),
        compiler_params=pltpu.CompilerParams(
            dimension_semantics=("parallel", "arbitrary"),
            vmem_limit_bytes=vmem_bytes),
    )(x2, m2)

    esum = jnp.sum(partial_sums)          # per-core partials → scalar
    msum = jnp.sum(gm)                    # mask count: tiny plain-XLA reduce

    if Tp < Tg:                           # uniform-extension rows, analytically
        esum = esum + _uniform_extension_entropy(mode, V) * jnp.sum(gm[:, Tp:])

    if reduction == "mean":
        ret = esum / msum
    elif reduction == "sum":
        ret = esum
    else:
        # TODO(synk): reduction='none' needs a per-row entropy output block.
        raise NotImplementedError(f"reduction '{reduction}' not implemented")

    mult = -1.0 if maximize else 1.0
    ret = ret * contrib * mult
    return {"entropy": ret, "loss": ret}


def _reference_entropy_loss(probs, golds, mask, *, contrib=1.0, maximize=True):
    """Pure-JAX transliteration of the PyTorch forward (mode='logits', mean, 2-D mask)."""
    B, Tp, V = probs.shape
    Tg = golds.shape[1]
    probs = probs.astype(jnp.float32)
    if Tp < Tg:
        ext = jnp.full((B, Tg - Tp, V), 1.0 / V, dtype=probs.dtype)
        probs = jnp.concatenate([probs, ext], axis=1)
    else:
        probs = probs[:, :Tg]
    p = jax.nn.softmax(probs, axis=-1)
    logp = jnp.maximum(jax.nn.log_softmax(p, axis=-1), _CLAMP_MIN)
    ent = -(p * logp).sum(-1)
    gm = mask.astype(jnp.float32)
    ent = ent * gm
    ret = ent.sum() / gm.sum()
    mult = -1.0 if maximize else 1.0
    return ret * contrib * mult


if __name__ == "__main__":
    key = jax.random.PRNGKey(0)
    B, Tg, V = 2, 8, 32

    gk, k1, k2, k3 = jax.random.split(key, 4)
    golds = jax.random.randint(gk, (B, Tg), 0, V, dtype=jnp.int32)
    lengths = jnp.array([6, 5], dtype=jnp.int32)
    mask = (jnp.arange(Tg)[None, :] < lengths[:, None])        # (B, Tg) bool

    cases = [("Tp==Tg", Tg, k1), ("Tp<Tg", 5, k2), ("Tp>Tg", 12, k3)]
    for name, Tp, pk in cases:
        probs = jax.random.normal(pk, (B, Tp, V), dtype=jnp.float32)  # logits
        out = entropy_loss(probs, golds, mask)
        loss = jax.block_until_ready(out["loss"])
        ref = _reference_entropy_loss(probs, golds, mask)
        assert jnp.allclose(loss, ref, rtol=1e-5, atol=1e-5), (name, loss, ref)

    print("KERNEL_OK")
</pallas_src>

<mosaic_0001>
module attributes {stable_mosaic.version = 11 : i64} {
  func.func @_entropy_kernel(%arg0: i32, %arg1: i32, %arg2: memref<16x32xf32, #tpu.memory_space<vmem>>, %arg3: memref<16x1xf32, #tpu.memory_space<vmem>>, %arg4: memref<1x1x1xf32, #tpu.memory_space<vmem>>) attributes {dimension_semantics = [#tpu.dimension_semantics<parallel>, #tpu.dimension_semantics<arbitrary>], iteration_bounds = array<i64: 2, 1>, scalar_prefetch = 0 : i64, scratch_operands = 0 : i64, tpu.core_type = #tpu.core_type<tc>, window_params = [{transform_indices = @transform_0, window_bounds = array<i64: 16, 32>}, {transform_indices = @transform_1, window_bounds = array<i64: 16, 1>}, {transform_indices = @transform_2, window_bounds = array<i64: 1, 1, 1>}]} {
    %c0_i32 = arith.constant 0 : i32
    %0 = arith.cmpi eq, %arg1, %c0_i32 : i32
    %1 = arith.extui %0 : i1 to i32
    %c0_i32_0 = arith.constant 0 : i32
    %2 = arith.cmpi ne, %1, %c0_i32_0 : i32
    scf.if %2 {
      %cst_18 = arith.constant 0.000000e+00 : f32
      %49 = vector.broadcast %cst_18 : f32 to vector<1x1x1xf32>
      %c0_19 = arith.constant 0 : index
      %c0_20 = arith.constant 0 : index
      %c0_21 = arith.constant 0 : index
      %50 = vector.load %arg4[%c0_19, %c0_20, %c0_21] : memref<1x1x1xf32, #tpu.memory_space<vmem>>, vector<1x1x1xf32>
      tpu.vector_store %arg4[%c0_19, %c0_20, %c0_21], %49 {strides = array<i32>} : memref<1x1x1xf32, #tpu.memory_space<vmem>>, vector<1x1x1xf32>,
    } else {
    }
    %c1_i32 = arith.constant 1 : i32
    %3 = arith.muli %arg0, %c1_i32 : i32
    %4 = arith.addi %3, %arg1 : i32
    %c16_i32 = arith.constant 16 : i32
    %5 = arith.muli %4, %c16_i32 : i32
    %6 = tpu.iota {dimensions = array<i32: 0>} : vector<16x1xi32>
    %7 = vector.broadcast %5 : i32 to vector<16x1xi32>
    %8 = arith.addi %7, %6 : vector<16x1xi32>
    %c16_i32_1 = arith.constant 16 : i32
    %9 = vector.broadcast %c16_i32_1 : i32 to vector<16x1xi32>
    %10 = arith.cmpi slt, %8, %9 : vector<16x1xi32>
    %c0 = arith.constant 0 : index
    %c0_2 = arith.constant 0 : index
    %11 = vector.load %arg3[%c0, %c0_2] : memref<16x1xf32, #tpu.memory_space<vmem>>, vector<16x1xf32>
    %cst = arith.constant 0.000000e+00 : f32
    %12 = vector.broadcast %cst : f32 to vector<16x1xf32>
    %13 = arith.select %10, %11, %12 : vector<16x1xi1>, vector<16x1xf32>
    %c0_3 = arith.constant 0 : index
    %c0_4 = arith.constant 0 : index
    %14 = vector.load %arg2[%c0_3, %c0_4] : memref<16x32xf32, #tpu.memory_space<vmem>>, vector<16x32xf32>
    %cst_5 = arith.constant 0.000000e+00 : f32
    %15 = vector.shape_cast %10 : vector<16x1xi1> to vector<16x1xi1>
    %16 = vector.broadcast %15 : vector<16x1xi1> to vector<16x32xi1>
    %17 = vector.broadcast %cst_5 : f32 to vector<16x32xf32>
    %18 = arith.select %16, %14, %17 : vector<16x32xi1>, vector<16x32xf32>
    %cst_6 = arith.constant dense<0xFF800000> : vector<16xf32>
    %19 = vector.multi_reduction <maximumf>, %18, %cst_6 [1] : vector<16x32xf32> to vector<16xf32>
    %20 = vector.shape_cast %19 : vector<16xf32> to vector<16x1xf32>
    %21 = vector.broadcast %20 : vector<16x1xf32> to vector<16x32xf32>
    %22 = arith.subf %18, %21 : vector<16x32xf32>
    %23 = math.exp %22 : vector<16x32xf32>
    %cst_7 = arith.constant dense<0.000000e+00> : vector<16xf32>
    %24 = vector.multi_reduction <add>, %23, %cst_7 [1] : vector<16x32xf32> to vector<16xf32>
    %25 = vector.shape_cast %24 : vector<16xf32> to vector<16x1xf32>
    %26 = tpu.reciprocal %25 : vector<16x1xf32> -> vector<16x1xf32>
    %27 = vector.broadcast %26 : vector<16x1xf32> to vector<16x32xf32>
    %28 = arith.mulf %23, %27 : vector<16x32xf32>
    %29 = math.exp %28 : vector<16x32xf32>
    %cst_8 = arith.constant dense<0.000000e+00> : vector<16xf32>
    %30 = vector.multi_reduction <add>, %29, %cst_8 [1] : vector<16x32xf32> to vector<16xf32>
    %31 = vector.shape_cast %30 : vector<16xf32> to vector<16x1xf32>
    %32 = math.log %31 : vector<16x1xf32>
    %33 = vector.broadcast %32 : vector<16x1xf32> to vector<16x32xf32>
    %34 = arith.subf %28, %33 : vector<16x32xf32>
    %35 = arith.mulf %28, %34 : vector<16x32xf32>
    %cst_9 = arith.constant dense<0.000000e+00> : vector<16xf32>
    %36 = vector.multi_reduction <add>, %35, %cst_9 [1] : vector<16x32xf32> to vector<16xf32>
    %37 = vector.shape_cast %36 : vector<16xf32> to vector<16x1xf32>
    %cst_10 = arith.constant 0.000000e+00 : f32
    %38 = vector.broadcast %cst_10 : f32 to vector<16x1xf32>
    %39 = arith.subf %38, %37 : vector<16x1xf32>
    %c0_11 = arith.constant 0 : index
    %c0_12 = arith.constant 0 : index
    %c0_13 = arith.constant 0 : index
    %40 = vector.load %arg4[%c0_11, %c0_12, %c0_13] : memref<1x1x1xf32, #tpu.memory_space<vmem>>, vector<1x1x1xf32>
    %41 = arith.mulf %39, %13 : vector<16x1xf32>
    %42 = vector.shape_cast %41 : vector<16x1xf32> to vector<1x16x1xf32>
    %cst_14 = arith.constant dense<0.000000e+00> : vector<1xf32>
    %43 = vector.multi_reduction <add>, %42, %cst_14 [1, 2] : vector<1x16x1xf32> to vector<1xf32>
    %44 = vector.shape_cast %43 : vector<1xf32> to vector<1x1x1xf32>
    %45 = vector.extract %44[0, 0, 0] : f32 from vector<1x1x1xf32>
    %46 = vector.broadcast %45 : f32 to vector<1x1x1xf32>
    %47 = arith.addf %40, %46 : vector<1x1x1xf32>
    %c0_15 = arith.constant 0 : index
    %c0_16 = arith.constant 0 : index
    %c0_17 = arith.constant 0 : index
    %48 = vector.load %arg4[%c0_15, %c0_16, %c0_17] : memref<1x1x1xf32, #tpu.memory_space<vmem>>, vector<1x1x1xf32>
    tpu.vector_store %arg4[%c0_15, %c0_16, %c0_17], %47 {strides = array<i32>} : memref<1x1x1xf32, #tpu.memory_space<vmem>>, vector<1x1x1xf32>,
    return
  }
  func.func @transform_0(%arg0: i32, %arg1: i32) -> (i32, i32) {
    %c1_i32 = arith.constant 1 : i32
    %0 = arith.muli %arg0, %c1_i32 : i32
    %1 = arith.addi %0, %arg1 : i32
    %c0_i32 = arith.constant 0 : i32
    %2 = arith.minsi %1, %c0_i32 : i32
    %c0_i32_0 = arith.constant 0 : i32
    %c0_i32_1 = arith.constant 0 : i32
    return %2, %c0_i32_0 : i32, i32
  }
  func.func @transform_1(%arg0: i32, %arg1: i32) -> (i32, i32) {
    %c1_i32 = arith.constant 1 : i32
    %0 = arith.muli %arg0, %c1_i32 : i32
    %1 = arith.addi %0, %arg1 : i32
    %c0_i32 = arith.constant 0 : i32
    %2 = arith.minsi %1, %c0_i32 : i32
    %c0_i32_0 = arith.constant 0 : i32
    %c0_i32_1 = arith.constant 0 : i32
    return %2, %c0_i32_0 : i32, i32
  }
  func.func @transform_2(%arg0: i32, %arg1: i32) -> (i32, i32, i32) {
    %c0_i32 = arith.constant 0 : i32
    %c0_i32_0 = arith.constant 0 : i32
    %c0_i32_1 = arith.constant 0 : i32
    return %arg0, %c0_i32, %c0_i32_0 : i32, i32, i32
  }
}

</mosaic_0001>

<llo_original>
// kernel: tpu_custom_call.1
$region0: #{tpu_custom_call.1}
  #allocation0 [shape = 'u32[]', space=smem, size = 0x4, offset = 0x4, fixed_abs, tag = 'smem constant byte address 0x4 - core index']
  #allocation1 [shape = 'u32[144,128]{1,0:T(1,128)}', space=vmem, size = 0x12000, scoped, tag = 'internal scratch']
  %s0 = inlined_call_operand.vmem [shape: f32[16,32], index: 0, kind: input, shape index: {}]
  %s1 = inlined_call_operand.vmem [shape: f32[16,1], index: 1, kind: input, shape index: {}]
  %s2 = inlined_call_operand.vmem [shape: f32[2,1,1], index: 2, kind: output, shape index: {}]
  %s3 = sld [smem:[#allocation0]]
  $region45: #{tpu_custom_call.1} parent=0
    _
  %s5 = ssub.s32 1, %s3
  %s6 = scalar_select 0, %s5, %s3
  loop: start=0, step=1, limit=4
  $region2: #{tpu_custom_call.1} parent=0 // loop_pre_header
    _
  $region3: #{tpu_custom_call.1} parent=0 // loop_header
    %s8 = sphi 0, %s12
    %p9 = scmp.ge.s32.totalorder %s8, 4
    %s15 = sphi 0, %s27
    %s16 = sphi 0, %s23
    %s17 = sphi 0, %s15
    %s18 = sphi 0, %s16
    %s19 = sphi 0, %s17
    %s20 = sphi 0, %s18
    %s36 = sphi 0, %s38
    %s39 = sphi 0, %s36
    %s40 = sphi 0, %s39
    %s56 = sphi 0, %s40
    %s68 = sphi 0, %s70
    %s71 = sphi 0, %s68
    %s72 = sphi 0, %s71
    %s88 = sphi 0, %s72
    %s94 = sphi 0, %s96
    %s97 = sphi 0, %s94
    %s98 = sphi 0, %s97
    %s114 = sphi 0, %s98
  $region4: #{tpu_custom_call.1} parent=0 // loop_header_branch
    %11 = sbr.rel (%p9) target = $region8
  $region5: #{tpu_custom_call.1} parent=0 // loop_body
    %s13 = ssub.s32 %s8, 1
    %s14 = ssub.s32 %s8, 2
    %s21 = sadd.s32 1, %s16
    %p22 = scmp.ge.s32.totalorder %s21, 1
    %s23 = scalar_select %p22, 0, %s21
    %s24 = sadd.s32 1, %s15
    %s25 = scalar_select %p22, %s24, %s15
    %p26 = scmp.ge.s32.totalorder %s25, 2
    %s27 = scalar_select %p26, 0, %s25
    %s28 = sadd.s32 %s15, %s16
    %p29 = scmp.lt.s32.totalorder %s28, 0
    %s30 = scalar_select %p29, %s28, 0
    %s31 = sadd.s32 %s27, %s23
    %p32 = scmp.lt.s32.totalorder %s31, 0
    %s33 = scalar_select %p32, %s31, 0
    %s34 = ssub.s32 %s30, %s33
    %p35 = scmp.eq.s32.totalorder %s34, 0
    %s37 = sadd.s32 %s36, 1
    %s38 = scalar_select %p35, %s36, %s37
    %p41 = pneg %p35
    %p42 = scmp.eq.s32.totalorder %s8, 1
    %p43 = por %p41, %p42
    %p44 = scmp.ne.s32.totalorder %s36, %s39
    %p45 = scmp.eq.s32.totalorder %s8, 0
    %p46 = por %p44, %p45
    %p47 = scmp.ne.s32.totalorder %s36, %s39
    %p48 = scmp.eq.s32.totalorder %s13, 1
    %p49 = por %p47, %p48
    %p50 = scmp.ne.s32.totalorder %s39, %s40
    %p51 = scmp.eq.s32.totalorder %s13, 0
    %p52 = por %p50, %p51
    %p53 = scmp.ne.s32.totalorder %s39, %s40
    %p54 = scmp.eq.s32.totalorder %s14, 1
    %p55 = por %p53, %p54
    %p57 = scmp.ne.s32.totalorder %s40, %s56
    %p58 = scmp.eq.s32.totalorder %s14, 0
    %p59 = por %p57, %p58
    %s60 = sadd.s32 %s15, %s16
    %p61 = scmp.lt.s32.totalorder %s60, 0
    %s62 = scalar_select %p61, %s60, 0
    %s63 = sadd.s32 %s27, %s23
    %p64 = scmp.lt.s32.totalorder %s63, 0
    %s65 = scalar_select %p64, %s63, 0
    %s66 = ssub.s32 %s62, %s65
    %p67 = scmp.eq.s32.totalorder %s66, 0
    %s69 = sadd.s32 %s68, 1
    %s70 = scalar_select %p67, %s68, %s69
    %p73 = pneg %p67
    %p74 = scmp.eq.s32.totalorder %s8, 1
    %p75 = por %p73, %p74
    %p76 = scmp.ne.s32.totalorder %s68, %s71
    %p77 = scmp.eq.s32.totalorder %s8, 0
    %p78 = por %p76, %p77
    %p79 = scmp.ne.s32.totalorder %s68, %s71
    %p80 = scmp.eq.s32.totalorder %s13, 1
    %p81 = por %p79, %p80
    %p82 = scmp.ne.s32.totalorder %s71, %s72
    %p83 = scmp.eq.s32.totalorder %s13, 0
    %p84 = por %p82, %p83
    %p85 = scmp.ne.s32.totalorder %s71, %s72
    %p86 = scmp.eq.s32.totalorder %s14, 1
    %p87 = por %p85, %p86
    %p89 = scmp.ne.s32.totalorder %s72, %s88
    %p90 = scmp.eq.s32.totalorder %s14, 0
    %p91 = por %p89, %p90
    %s92 = ssub.s32 %s15, %s27
    %p93 = scmp.eq.s32.totalorder %s92, 0
    %s95 = sadd.s32 %s94, 1
    %s96 = scalar_select %p93, %s94, %s95
    %p99 = pneg %p93
    %p100 = scmp.eq.s32.totalorder %s8, 1
    %p101 = por %p99, %p100
    %p102 = scmp.ne.s32.totalorder %s94, %s97
    %p103 = scmp.eq.s32.totalorder %s8, 0
    %p104 = por %p102, %p103
    %p105 = scmp.ne.s32.totalorder %s94, %s97
    %p106 = scmp.eq.s32.totalorder %s13, 1
    %p107 = por %p105, %p106
    %p108 = scmp.ne.s32.totalorder %s97, %s98
    %p109 = scmp.eq.s32.totalorder %s13, 0
    %p110 = por %p108, %p109
    %p111 = scmp.ne.s32.totalorder %s97, %s98
    %p112 = scmp.eq.s32.totalorder %s14, 1
    %p113 = por %p111, %p112
    %p115 = scmp.ne.s32.totalorder %s98, %s114
    %p116 = scmp.eq.s32.totalorder %s14, 0
    %p117 = por %p115, %p116
    %p118 = scmp.le.s32.totalorder 1, %s8
    %p119 = scmp.lt.s32.totalorder %s8, 3
    %p120 = pnand %p118, %p119
    %p121 = pneg %p120
    // Predicated region
    $region9: #{tpu_custom_call.1} parent=5 // pred_check
      _
    $region10: #{tpu_custom_call.1} parent=5 // pred_check_branch
      %123 = sbr.rel (%p120) target = $region12
    $region11: #{tpu_custom_call.1} parent=5 // pred_region
      %s124 = ssub.s32 %s8, 1
    $region12: #{tpu_custom_call.1} parent=5 // pred_fallthru
      _
    %p125 = scmp.lt.s32.totalorder %s8, 2
    // Predicated region
    $region13: #{tpu_custom_call.1} parent=5 // pred_check
      %p126 = pneg %p125
    $region14: #{tpu_custom_call.1} parent=5 // pred_check_branch
      %128 = sbr.rel (%p126) target = $region16
    $region15: #{tpu_custom_call.1} parent=5 // pred_region
      // Predicated region
      $region17: #{tpu_custom_call.1} parent=15 // pred_check
        %p129 = pneg %p46
      $region18: #{tpu_custom_call.1} parent=15 // pred_check_branch
        %131 = sbr.rel (%p129) target = $region20
      $region19: #{tpu_custom_call.1} parent=15 // pred_region
        %s132 = sadd.s32 %s15, %s16
        %p133 = scmp.lt.s32.totalorder %s132, 0
        %s134 = scalar_select %p133, %s132, 0
        %s135 = smul.u32 2, %s134
        %p136 = scmp.lt.s32.totalorder %s135, 1
        %s137 = scalar_select %p136, %s135, 1
        %s138 = smul.addr %s137, 8
        %s139 = scalar_lea.vmem %s0, %s138
        %s140 = sadd.s32 %s15, %s16
        %p141 = scmp.lt.s32.totalorder %s140, 0
        %s142 = scalar_select %p141, %s140, 0
        %s143 = smul.u32 2, %s142
      $region20: #{tpu_custom_call.1} parent=15 // pred_fallthru
        _
      // Predicated region
      $region21: #{tpu_custom_call.1} parent=15 // pred_check
        %p144 = pneg %p78
      $region22: #{tpu_custom_call.1} parent=15 // pred_check_branch
        %146 = sbr.rel (%p144) target = $region24
      $region23: #{tpu_custom_call.1} parent=15 // pred_region
        %s147 = sadd.s32 %s15, %s16
        %p148 = scmp.lt.s32.totalorder %s147, 0
        %s149 = scalar_select %p148, %s147, 0
        %s150 = smul.u32 2, %s149
        %p151 = scmp.lt.s32.totalorder %s150, 1
        %s152 = scalar_select %p151, %s150, 1
        %s153 = smul.addr %s152, 8
        %s154 = scalar_lea.vmem %s1, %s153
        %s155 = sadd.s32 %s15, %s16
        %p156 = scmp.lt.s32.totalorder %s155, 0
        %s157 = scalar_select %p156, %s155, 0
        %s158 = smul.u32 2, %s157
      $region24: #{tpu_custom_call.1} parent=15 // pred_fallthru
        _
    $region16: #{tpu_custom_call.1} parent=5 // pred_fallthru
      _
    %p159 = scmp.le.s32.totalorder 1, %s8
    %p160 = scmp.lt.s32.totalorder %s8, 3
    %p161 = pnand %p159, %p160
    %p162 = pneg %p161
    // Predicated region
    $region25: #{tpu_custom_call.1} parent=5 // pred_check
      _
    $region26: #{tpu_custom_call.1} parent=5 // pred_check_branch
      %164 = sbr.rel (%p161) target = $region28
    $region27: #{tpu_custom_call.1} parent=5 // pred_region
      %s165 = ssub.s32 %s8, 1
      %s166 = sadd.s32 %s17, %s18
      %p167 = scmp.lt.s32.totalorder %s166, 0
      %s168 = scalar_select %p167, %s166, 0
      %s169 = smul.u32 2, %s168
      %p170 = scmp.lt.s32.totalorder %s169, 1
      %s171 = scalar_select %p170, %s169, 1
      %s172 = smul.addr %s171, 8
      %s173 = scalar_lea.vmem %s0, %s172
      %p174 = pneg %p52
      %p175 = pneg %p49
      %s176 = sadd.s32 %s17, %s18
      %p177 = scmp.lt.s32.totalorder %s176, 0
      %s178 = scalar_select %p177, %s176, 0
      %s179 = smul.u32 2, %s178
      %p180 = scmp.lt.s32.totalorder %s179, 1
      %s181 = scalar_select %p180, %s179, 1
      %s182 = smul.addr %s181, 8
      %s183 = scalar_lea.vmem %s1, %s182
      %p184 = pneg %p84
      %p185 = pneg %p81
      %p186 = pneg %p110
      %p187 = pneg %p107
      %p188 = scmp.lt.s32.totalorder %s17, 1
      %s189 = scalar_select %p188, %s17, 1
      %s190 = scalar_lea.vmem %s2, %s189
      %s191 = sadd.s32 %s17, %s18
      %p192 = scmp.lt.s32.totalorder %s191, 0
      %s193 = scalar_select %p192, %s191, 0
      %s194 = smul.u32 2, %s193
      %p195 = scmp.lt.s32.totalorder %s194, 1
      %s196 = scalar_select %p195, %s194, 1
      %s197 = smul.addr %s196, 8
      %s198 = scalar_lea.vmem %s0, %s197
      %s199 = sadd.s32 %s17, %s18
      %p200 = scmp.lt.s32.totalorder %s199, 0
      %s201 = scalar_select %p200, %s199, 0
      %s202 = smul.u32 2, %s201
      %s203 = sadd.s32 %s17, %s18
      %p204 = scmp.lt.s32.totalorder %s203, 0
      %s205 = scalar_select %p204, %s203, 0
      %s206 = smul.u32 2, %s205
      %p207 = scmp.lt.s32.totalorder %s206, 1
      %s208 = scalar_select %p207, %s206, 1
      %s209 = smul.addr %s208, 8
      %s210 = scalar_lea.vmem %s1, %s209
      %s211 = sadd.s32 %s17, %s18
      %p212 = scmp.lt.s32.totalorder %s211, 0
      %s213 = scalar_select %p212, %s211, 0
      %s214 = smul.u32 2, %s213
      %p215 = scmp.lt.s32.totalorder %s17, 1
      %s216 = scalar_select %p215, %s17, 1
      %s217 = scalar_lea.vmem %s2, %s216
      %p218 = scmp.eq.s32.totalorder %s18, 0
      // Predicated region
      $region29: #{tpu_custom_call.1} parent=27 // pred_check
        %p219 = pneg %p218
      $region30: #{tpu_custom_call.1} parent=27 // pred_check_branch
        %221 = sbr.rel (%p219) target = $region32
      $region31: #{tpu_custom_call.1} parent=27 // pred_region
        %vm222 = vcmask 0
        %223 = vst.msk [vmem:[%s217] sm:$0x1] %vm222, 0.0
      $region32: #{tpu_custom_call.1} parent=27 // pred_fallthru
        _
      %s224 = sadd.s32 %s17, %s18
      %s225 = smul.u32 %s224, 16
      %v226 = vlaneseq
      %v227 = vshrl.u32 %v226, 7
      %v228 = vadd.s32 %v227, 8
      %v229 = vstv %s225
      %v230 = vadd.s32 %v229, %v227
      %v231 = vadd.s32 %v229, %v228
      %vm232 = vcmp.lt.s32.totalorder %v230, 16
      %vm233 = vcmp.lt.s32.totalorder %v231, 16
      %v234 = vld [vmem:[%s210] sm:$0xff]
      %v235 = vld [vmem:[%s210 + $0x8] sm:$0xff]
      %v236 = vsel %vm232, %v234, 0.0
      %v237 = vsel %vm233, %v235, 0.0
      %v238 = vld [vmem:[%s198] sm:$0xff]
      %v239 = vld [vmem:[%s198 + $0x8] sm:$0xff]
      %v240 = vsel %vm232, 1, 0
      %v241 = vsel %vm233, 1, 0
      %vm242 = vcmp.eq.s32.totalorder %v240, 1
      %vm243 = vcmp.eq.s32.totalorder %v241, 1
      %v244 = vsel %vm242, %v238, 0.0
      %v245 = vsel %vm243, %v239, 0.0
      %vm246 = vcmask 261120
      %v247 = vsel %vm246, %v244, -inf
      %248 = vmax.xlane.f32.xlu0 %v247
      %v249 = vpop.xlane.xlu0 %248
      %v250 = vsel %vm246, %v245, -inf
      %251 = vmax.xlane.f32.xlu0 %v250
      %v252 = vpop.xlane.xlu0 %251
      %v253 = vsub.f32 %v244, %v249
      %v254 = vsub.f32 %v245, %v252
      %v255 = vmul.f32 %v253, 1.442695
      %v256 = vpow.pop %v255
      %v257 = vmul.f32 %v254, 1.442695
      %v258 = vpow.pop %v257
      %v259 = vsel %vm246, %v256, 0.0
      %260 = vadd.xlane.f32.xlu0 %v259
      %v261 = vpop.xlane.xlu0 %260
      %v262 = vsel %vm246, %v258, 0.0
      %263 = vadd.xlane.f32.xlu0 %v262
      %v264 = vpop.xlane.xlu0 %263
      %v265 = vrcp.pop %v261
      %v266 = vrcp.pop %v264
      %v267 = vmul.f32 %v256, %v265
      %v268 = vmul.f32 %v258, %v266
      %v269 = vmul.f32 %v267, 1.442695
      %v270 = vpow.pop %v269
      %v271 = vmul.f32 %v268, 1.442695
      %v272 = vpow.pop %v271
      %v273 = vsel %vm246, %v270, 0.0
      %274 = vadd.xlane.f32.xlu0 %v273
      %v275 = vpop.xlane.xlu0 %274
      %v276 = vsel %vm246, %v272, 0.0
      %277 = vadd.xlane.f32.xlu0 %v276
      %v278 = vpop.xlane.xlu0 %277
      %v279 = vlog2.pop %v275
      %v280 = vmul.f32 %v279, 0.6931472
      %v281 = vlog2.pop %v278
      %v282 = vmul.f32 %v281, 0.6931472
      %v283 = vsub.f32 %v267, %v280
      %v284 = vsub.f32 %v268, %v282
      %v285 = vmul.f32 %v267, %v283
      %v286 = vmul.f32 %v268, %v284
      %v287 = vsel %vm246, %v285, 0.0
      %288 = vadd.xlane.f32.xlu0 %v287
      %v289 = vpop.xlane.xlu0 %288
      %v290 = vsel %vm246, %v286, 0.0
      %291 = vadd.xlane.f32.xlu0 %v290
      %v292 = vpop.xlane.xlu0 %291
      %v293 = vsub.f32 0.0, %v289
      %v294 = vsub.f32 0.0, %v292
      %v295 = vld [vmem:[%s217] sm:$0x1]
      %v296 = vmul.f32 %v293, %v236
      %v297 = vmul.f32 %v294, %v237
      %vm298 = vcmask 7168
      %v299 = vsel %vm298, %v296, 0.0
      %v300 = vsel %vm298, %v297, 0.0
      %v301 = vadd.f32 %v299, %v300
      %302 = vadd.xlane.f32.xlu0 %v301
      %v303 = vpop.xlane.xlu0 %302
      %v304 = vrot.slane %v303, 4
      %v305 = vadd.f32 %v303, %v304
      %v306 = vrot.slane %v305, 2
      %v307 = vadd.f32 %v305, %v306
      %v308 = vrot.slane %v307, 1
      %v309 = vadd.f32 %v307, %v308
      %s310 = vtos %v309
      %v311 = vstv %s310
      %v312 = vadd.f32 %v295, %v311
      %vm313 = vcmask 0
      %314 = vst.msk [vmem:[%s217] sm:$0x1] %vm313, %v312
      %p315 = scmp.lt.s32.totalorder %s17, 1
      %s316 = scalar_select %p315, %s17, 1
      %s317 = scalar_lea.vmem %s2, %s316
      // Predicated region
      $region33: #{tpu_custom_call.1} parent=27 // pred_check
        %p318 = pneg %p107
      $region34: #{tpu_custom_call.1} parent=27 // pred_check_branch
        %320 = sbr.rel (%p318) target = $region36
      $region35: #{tpu_custom_call.1} parent=27 // pred_region
        _
      $region36: #{tpu_custom_call.1} parent=27 // pred_fallthru
        _
    $region28: #{tpu_custom_call.1} parent=5 // pred_fallthru
      _
    %p321 = scmp.le.s32.totalorder 2, %s8
    // Predicated region
    $region37: #{tpu_custom_call.1} parent=5 // pred_check
      %p322 = pneg %p321
    $region38: #{tpu_custom_call.1} parent=5 // pred_check_branch
      %324 = sbr.rel (%p322) target = $region40
    $region39: #{tpu_custom_call.1} parent=5 // pred_region
      %s325 = ssub.s32 %s8, 2
      // Predicated region
      $region41: #{tpu_custom_call.1} parent=39 // pred_check
        %p326 = pneg %p113
      $region42: #{tpu_custom_call.1} parent=39 // pred_check_branch
        %328 = sbr.rel (%p326) target = $region44
      $region43: #{tpu_custom_call.1} parent=39 // pred_region
        %p329 = scmp.lt.s32.totalorder %s19, 1
        %s330 = scalar_select %p329, %s19, 1
        %s331 = scalar_lea.vmem %s2, %s330
      $region44: #{tpu_custom_call.1} parent=39 // pred_fallthru
        _
    $region40: #{tpu_custom_call.1} parent=5 // pred_fallthru
      _
  $region6: #{tpu_custom_call.1} parent=0 // loop_footer
    %s12 = sadd.s32 1, %s8
  $region7: #{tpu_custom_call.1} parent=0 // loop_footer_branch
    %7 = sbr.rel target = $region3
  $region8: #{tpu_custom_call.1} parent=0 // loop_exit
    _

</llo_original>
